<compile_context>
chip_gen: v7x
topology: tpu7x:2x2x1
jax: 0.10.0
libtpu: 0.0.40
codegen_flags: <defaults>
</compile_context>

<pallas_src>
import math
import numpy as np

import jax
import jax.numpy as jnp
from jax import lax
from jax.experimental import pallas as pl
from jax.experimental.pallas import tpu as pltpu


# ----------------------------------------------------------------------------
# Config (Where2comm args['communication'])
# ----------------------------------------------------------------------------
THRESHOLD = 0.30
K_SIZE = 3          # gaussian_smooth.k_size (odd)
C_SIGMA = 1.0       # gaussian_smooth.c_sigma


def _cdiv(a, b):
    return -(-a // b)


def _gaussian_sep_coeffs(k_size, sigma):
    """Separable factors of the reference 2-D gaussian: g[a,b] = gy[a]*gx[b]."""
    c = k_size // 2
    offs = np.arange(k_size, dtype=np.float64) - c
    gy = (1.0 / (2.0 * np.pi * sigma)) * np.exp(-(offs ** 2) / (2.0 * sigma ** 2))
    gx = np.exp(-(offs ** 2) / (2.0 * sigma ** 2))
    return [float(v) for v in gy], [float(v) for v in gx], c


def _edge_masks(H, W, HW_pad, radius):
    """(4*radius + 1, HW_pad) f32 validity masks for lane-rolled neighbours on
    the row-major flattened (and lane-padded) spatial axis.  Last row marks the
    real (n < H*W) lanes."""
    HW = H * W
    n = np.arange(HW_pad)
    col = n % W
    row = n // W
    inb = n < HW
    ms = []
    for o in range(1, radius + 1):
        ms.append((col < W - o) & inb)   # neighbour (i, j+o) valid
    for o in range(1, radius + 1):
        ms.append((col >= o) & inb)      # neighbour (i, j-o) valid
    for o in range(1, radius + 1):
        ms.append((row < H - o) & inb)   # neighbour (i+o, j) valid
    for o in range(1, radius + 1):
        ms.append((row >= o) & inb)      # neighbour (i-o, j) valid
    ms.append(inb)                       # lane is a real spatial location
    return np.stack(ms).astype(np.float32)


def _vmem_capacity_bytes():
    try:
        return int(pltpu.get_tpu_info().vmem_capacity_bytes)
    except Exception:
        return 64 * 1024 * 1024   # conservative (v7x-sized) fallback


def _pick_tile_n(HW, Lmax, C, vmem_cap):
    """Lane-tile size for the fusion kernel, sized from the VMEM budget."""
    budget = max(vmem_cap // 2, 4 * 1024 * 1024)
    per_lane = (2 * Lmax * C * 2        # x (bf16), double-buffered
                + 2 * Lmax * 4          # mask (f32), double-buffered
                + 2 * C * 4             # fused out (f32), double-buffered
                + 3 * C * 4             # f32 temporaries (x0, xl, fused acc)
                + 8 * Lmax * 4)         # small (Lmax, TN) f32 temporaries
    tn = (budget // per_lane) // 128 * 128
    tn_cap = 4096 if vmem_cap > 96 * 1024 * 1024 else 2048   # v5e/v6e vs v7x
    tn = int(max(128, min(tn, tn_cap)))
    return min(tn, _cdiv(HW, 128) * 128)


# ----------------------------------------------------------------------------
# Kernel 1: Communication (sigmoid -> anchor max -> gaussian -> threshold)
# ----------------------------------------------------------------------------
def _make_comm_kernel(Lmax, A, W, HW_pad, gy, gx, radius, threshold):
    def kernel(rl_ref, psm_ref, em_ref, mask_ref, ego_ref, rsum_ref):
        # rl_ref  : (B,)                int32 record_len (SMEM, scalar prefetch)
        # psm_ref : (1, Lmax, A, HWp)   detection logits (bf16)
        # em_ref  : (4r+1, HWp)         edge-validity + lane-validity masks
        # mask_ref: (1, Lmax, HWp)      comm mask out (ego row forced to 1)
        # ego_ref : (1, 1, HWp)         raw (pre ego-override) ego mask out
        # rsum_ref: (1, Lmax, 1)        per-cav raw-mask sums out
        b = pl.program_id(0)
        L_b = rl_ref[b]

        psm = psm_ref[0].astype(jnp.float32)                     # (Lmax, A, HWp)
        conf = jnp.max(jax.nn.sigmoid(psm), axis=1)              # (Lmax, HWp)

        # Separable gaussian smoothing == Conv2d(1,1,k,pad=same,zero-pad),
        # done as lane rolls (XLU) + masked adds (VPU) on the flattened maps.
        tmp = jnp.float32(gx[radius]) * conf                     # column pass
        for o in range(1, radius + 1):
            m_next = em_ref[o - 1:o, :]                          # (1, HWp)
            m_prev = em_ref[radius + o - 1:radius + o, :]
            nxt = pltpu.roll(conf, shift=HW_pad - o, axis=1) * m_next   # c[n+o]
            prv = pltpu.roll(conf, shift=o, axis=1) * m_prev            # c[n-o]
            tmp = tmp + jnp.float32(gx[radius + o]) * (nxt + prv)
        sm = jnp.float32(gy[radius]) * tmp                       # row pass
        for o in range(1, radius + 1):
            m_dn = em_ref[2 * radius + o - 1:2 * radius + o, :]
            m_up = em_ref[3 * radius + o - 1:3 * radius + o, :]
            dn = pltpu.roll(tmp, shift=HW_pad - o * W, axis=1) * m_dn   # t[n+oW]
            up = pltpu.roll(tmp, shift=o * W, axis=1) * m_up            # t[n-oW]
            sm = sm + jnp.float32(gy[radius + o]) * (dn + up)

        thr = jnp.where(sm > jnp.float32(threshold),
                        jnp.float32(1.0), jnp.float32(0.0))      # (Lmax, HWp)
        lane_valid = em_ref[4 * radius:4 * radius + 1, :]        # (1, HWp)
        cav = lax.broadcasted_iota(jnp.int32, (Lmax, 1), 0)
        cav_valid = (cav < L_b).astype(jnp.float32)              # (Lmax, 1)
        raw = thr * lane_valid * cav_valid                       # pre ego-override

        rsum_ref[0] = jnp.sum(raw, axis=1, keepdims=True)        # (Lmax, 1)
        ego_ref[0] = raw[0:1]                                    # raw ego mask
        mask_ref[0] = jnp.where(cav == 0, jnp.float32(1.0), raw) # ego row -> 1

    return kernel


# ----------------------------------------------------------------------------
# Kernel 2: AttentionFusion (ego-query scaled-dot-product attention over cavs)
# ----------------------------------------------------------------------------
def _make_fuse_kernel(Lmax, C, TN):
    inv_sqrt_c = float(1.0 / math.sqrt(C))

    def kernel(rl_ref, mask_ref, x_ref, out_ref):
        # rl_ref  : (B,)               int32 record_len (SMEM, scalar prefetch)
        # mask_ref: (1, Lmax, TN)      comm mask (ego row already 1)
        # x_ref   : (1, Lmax, C, TN)   features (bf16)
        # out_ref : (1, C, TN)         fused ego feature tile
        b = pl.program_id(0)
        L_b = rl_ref[b]

        mask = mask_ref[0]                                       # (Lmax, TN)
        x0 = x_ref[0, 0].astype(jnp.float32)                     # (C, TN) ego

        # mask folded algebraically: score_l = mask_l * <x0, x_l> / sqrt(C)
        dots = [jnp.sum(x0 * x0, axis=0, keepdims=True)]         # (1, TN)
        for l in range(1, Lmax):
            xl = x_ref[0, l].astype(jnp.float32)
            dots.append(jnp.sum(x0 * xl, axis=0, keepdims=True))
        dot = jnp.concatenate(dots, axis=0)                      # (Lmax, TN)

        cav = lax.broadcasted_iota(jnp.int32, (Lmax, 1), 0)
        bias = jnp.where(cav < L_b, jnp.float32(0.0), jnp.float32(-1e30))
        score = mask * dot * jnp.float32(inv_sqrt_c) + bias      # (Lmax, TN)
        score = score - jnp.max(score, axis=0, keepdims=True)
        e = jnp.exp(score)
        attn = e * pl.reciprocal(jnp.sum(e, axis=0, keepdims=True), approx=True)

        w = attn * mask                                          # (Lmax, TN)
        fused = w[0:1, :] * x0                                   # (C, TN)
        for l in range(1, Lmax):
            xl = x_ref[0, l].astype(jnp.float32)
            fused = fused + w[l:l + 1, :] * xl
        out_ref[0] = fused.astype(out_ref.dtype)

    return kernel


# ----------------------------------------------------------------------------
# Wrapper: jitted pad/cast prep + the two pallas_calls + rate reduction.
# ----------------------------------------------------------------------------
_FWD_CACHE = {}


def _build_forward(B, Lmax, C, A, H, W, record_len, in_dtype):
    HW = H * W
    vmem_cap = _vmem_capacity_bytes()
    TN = _pick_tile_n(HW, Lmax, C, vmem_cap)
    HW_pad = _cdiv(HW, TN) * TN
    NT = HW_pad // TN
    vmem_limit = int(min(int(vmem_cap * 0.75), vmem_cap - 4 * 1024 * 1024))

    gy, gx, radius = _gaussian_sep_coeffs(K_SIZE, C_SIGMA)
    em = jnp.asarray(_edge_masks(H, W, HW_pad, radius))          # (4r+1, HWp)

    # Static gather indices: padded cav slots replicate the ego row; they are
    # masked out inside the kernels (cav_valid / -1e30 bias), so no zero-fill
    # pass over x is needed.
    offs = np.concatenate([[0], np.cumsum(record_len)]).astype(np.int64)
    src_np = np.zeros((B, Lmax), dtype=np.int32)
    for b in range(B):
        L = record_len[b]
        src_np[b, :L] = np.arange(offs[b], offs[b] + L)
        src_np[b, L:] = offs[b]
    src = jnp.asarray(src_np)
    rl_arr = jnp.asarray(record_len, dtype=jnp.int32)

    comm_call = pl.pallas_call(
        _make_comm_kernel(Lmax, A, W, HW_pad, gy, gx, radius, THRESHOLD),
        out_shape=(
            jax.ShapeDtypeStruct((B, Lmax, HW_pad), jnp.float32),  # comm masks (ego=1)
            jax.ShapeDtypeStruct((B, 1, HW_pad), jnp.float32),     # raw ego masks
            jax.ShapeDtypeStruct((B, Lmax, 1), jnp.float32),       # raw mask row sums
        ),
        grid_spec=pltpu.PrefetchScalarGridSpec(
            num_scalar_prefetch=1,
            grid=(B,),
            in_specs=[
                pl.BlockSpec((1, Lmax, A, HW_pad), lambda b, rl: (b, 0, 0, 0)),
                pl.BlockSpec((4 * radius + 1, HW_pad), lambda b, rl: (0, 0)),
            ],
            out_specs=(
                pl.BlockSpec((1, Lmax, HW_pad), lambda b, rl: (b, 0, 0)),
                pl.BlockSpec((1, 1, HW_pad), lambda b, rl: (b, 0, 0)),
                pl.BlockSpec((1, Lmax, 1), lambda b, rl: (b, 0, 0)),
            ),
        ),
        compiler_params=pltpu.CompilerParams(
            dimension_semantics=("parallel",),
            vmem_limit_bytes=vmem_limit,
        ),
    )

    fuse_call = pl.pallas_call(
        _make_fuse_kernel(Lmax, C, TN),
        out_shape=jax.ShapeDtypeStruct((B, C, HW_pad), in_dtype),
        grid_spec=pltpu.PrefetchScalarGridSpec(
            num_scalar_prefetch=1,
            grid=(B, NT),
            in_specs=[
                pl.BlockSpec((1, Lmax, TN), lambda b, nt, rl: (b, 0, nt)),
                pl.BlockSpec((1, Lmax, C, TN), lambda b, nt, rl: (b, 0, 0, nt)),
            ],
            out_specs=pl.BlockSpec((1, C, TN), lambda b, nt, rl: (b, 0, nt)),
        ),
        compiler_params=pltpu.CompilerParams(
            dimension_semantics=("parallel", "parallel"),
            vmem_limit_bytes=vmem_limit,
        ),
    )

    @jax.jit
    def fwd(x, psm):
        xf = x.reshape(-1, C, HW)
        pf = psm.reshape(-1, A, HW)
        # One fused gather + bf16 cast (no per-sample concat/stack copies).
        x_pad = xf[src].astype(jnp.bfloat16)        # (B, Lmax, C, HW)
        psm_pad = pf[src].astype(jnp.bfloat16)      # (B, Lmax, A, HW)
        if HW_pad != HW:
            pad = HW_pad - HW
            x_pad = jnp.pad(x_pad, ((0, 0), (0, 0), (0, 0), (0, pad)))
            psm_pad = jnp.pad(psm_pad, ((0, 0), (0, 0), (0, 0), (0, pad)))

        masks, ego, rsums = comm_call(rl_arr, psm_pad, em)
        fused = fuse_call(rl_arr, masks, x_pad)

        x_fuse = fused[:, :, :HW].reshape(B, C, H, W)
        # torch reference: rate_b = mask.sum() / (L_b * H * W); rates = sum_b / B
        msum = jnp.sum(rsums[:, :, 0], axis=1)                           # (B,)
        rates = msum / (rl_arr.astype(jnp.float32) * jnp.float32(HW))
        communication_rates = jnp.sum(rates) / B
        ego_comm_mask = ego[0, :, :HW].reshape(1, 1, H, W)               # sample 0, raw
        return x_fuse, communication_rates, ego_comm_mask

    return fwd


def where2comm_forward(x, psm_single, record_len, pairwise_t_matrix):
    """x: (sum(n_cav), C, H, W); psm_single: (sum(n_cav), A, H, W);
    record_len: host-side list of ints; pairwise_t_matrix: (B, L, L, 4, 4)."""
    Ncav, C, H, W = x.shape
    A = psm_single.shape[1]
    B = pairwise_t_matrix.shape[0]
    record_len = tuple(int(v) for v in record_len)
    assert len(record_len) == B and sum(record_len) == Ncav
    assert K_SIZE % 2 == 1 and K_SIZE >= 3
    Lmax = max(record_len)

    key = (B, Lmax, C, A, H, W, record_len, str(jnp.dtype(x.dtype)))
    if key not in _FWD_CACHE:
        _FWD_CACHE[key] = _build_forward(B, Lmax, C, A, H, W, record_len, x.dtype)
    return _FWD_CACHE[key](x, psm_single)


if __name__ == "__main__":
    key = jax.random.PRNGKey(0)
    B = 2
    record_len = [2, 2]          # cavs per batch sample
    C, A, H, W = 8, 2, 16, 16    # feature channels, anchors, spatial dims
    Ncav = sum(record_len)
    Lmax = max(record_len)

    k1, k2 = jax.random.split(key)
    x = jax.random.normal(k1, (Ncav, C, H, W), dtype=jnp.float32)
    psm_single = jax.random.normal(k2, (Ncav, A, H, W), dtype=jnp.float32)
    pairwise_t_matrix = jnp.tile(jnp.eye(4, dtype=jnp.float32),
                                 (B, Lmax, Lmax, 1, 1))   # (B, L, L, 4, 4)

    x_fuse, comm_rate, ego_mask = where2comm_forward(
        x, psm_single, record_len, pairwise_t_matrix
    )
    jax.block_until_ready((x_fuse, comm_rate, ego_mask))

    assert x_fuse.shape == (B, C, H, W)
    assert ego_mask.shape == (1, 1, H, W)
    assert bool(jnp.all(jnp.isfinite(x_fuse)))
    assert bool(jnp.isfinite(comm_rate))
    print("KERNEL_OK")
</pallas_src>

<mosaic_0001>
module attributes {stable_mosaic.version = 11 : i64} {
  func.func @kernel(%arg0: i32, %arg1: memref<2xi32, #tpu.memory_space<smem>>, %arg2: memref<1x2x2x256xbf16, #tpu.memory_space<vmem>>, %arg3: memref<5x256xf32, #tpu.memory_space<vmem>>, %arg4: memref<1x2x256xf32, #tpu.memory_space<vmem>>, %arg5: memref<1x1x256xf32, #tpu.memory_space<vmem>>, %arg6: memref<1x2x1xf32, #tpu.memory_space<vmem>>) attributes {dimension_semantics = [#tpu.dimension_semantics<parallel>], iteration_bounds = array<i64: 2>, scalar_prefetch = 1 : i64, scratch_operands = 0 : i64, tpu.core_type = #tpu.core_type<tc>, window_params = [{transform_indices = @transform_0, window_bounds = array<i64: 1, 2, 2, 256>}, {pipeline_mode = #tpu.pipeline_mode<synchronous>, transform_indices = @transform_1, window_bounds = array<i64: 5, 256>}, {transform_indices = @transform_2, window_bounds = array<i64: 1, 2, 256>}, {transform_indices = @transform_3, window_bounds = array<i64: 1, 1, 256>}, {transform_indices = @transform_4, window_bounds = array<i64: 1, 2, 1>}]} {
    %0 = arith.index_cast %arg0 : i32 to index
    %1 = memref.load %arg1[%0] : memref<2xi32, #tpu.memory_space<smem>>
    %c0 = arith.constant 0 : index
    %c0_0 = arith.constant 0 : index
    %c0_1 = arith.constant 0 : index
    %c0_2 = arith.constant 0 : index
    %2 = vector.load %arg2[%c0, %c0_0, %c0_1, %c0_2] : memref<1x2x2x256xbf16, #tpu.memory_space<vmem>>, vector<1x2x2x256xbf16>
    %3 = vector.shape_cast %2 : vector<1x2x2x256xbf16> to vector<2x2x256xbf16>
    %4 = arith.extf %3 : vector<2x2x256xbf16> to vector<2x2x256xf32>
    %5 = arith.negf %4 : vector<2x2x256xf32>
    %6 = math.exp %5 : vector<2x2x256xf32>
    %cst = arith.constant 1.000000e+00 : f32
    %7 = vector.broadcast %cst : f32 to vector<2x2x256xf32>
    %8 = arith.addf %7, %6 : vector<2x2x256xf32>
    %9 = arith.divf %7, %8 : vector<2x2x256xf32>
    %cst_3 = arith.constant dense<0xFF800000> : vector<2x256xf32>
    %10 = vector.multi_reduction <maximumf>, %9, %cst_3 [1] : vector<2x2x256xf32> to vector<2x256xf32>
    %cst_4 = arith.constant 1.000000e+00 : f32
    %11 = vector.broadcast %cst_4 : f32 to vector<2x256xf32>
    %12 = arith.mulf %11, %10 : vector<2x256xf32>
    %c0_5 = arith.constant 0 : index
    %c0_6 = arith.constant 0 : index
    %13 = vector.load %arg3[%c0_5, %c0_6] : memref<5x256xf32, #tpu.memory_space<vmem>>, vector<1x256xf32>
    %c1 = arith.constant 1 : index
    %c0_7 = arith.constant 0 : index
    %14 = vector.load %arg3[%c1, %c0_7] : memref<5x256xf32, #tpu.memory_space<vmem>>, vector<1x256xf32>
    %c255_i32 = arith.constant 255 : i32
    %15 = tpu.dynamic_rotate %10 by %c255_i32 dim 1 : vector<2x256xf32>, i32 -> vector<2x256xf32>
    %16 = vector.broadcast %13 : vector<1x256xf32> to vector<2x256xf32>
    %17 = arith.mulf %15, %16 : vector<2x256xf32>
    %c1_i32 = arith.constant 1 : i32
    %18 = tpu.dynamic_rotate %10 by %c1_i32 dim 1 : vector<2x256xf32>, i32 -> vector<2x256xf32>
    %19 = vector.broadcast %14 : vector<1x256xf32> to vector<2x256xf32>
    %20 = arith.mulf %18, %19 : vector<2x256xf32>
    %21 = arith.addf %17, %20 : vector<2x256xf32>
    %cst_8 = arith.constant 0.606530666 : f32
    %22 = vector.broadcast %cst_8 : f32 to vector<2x256xf32>
    %23 = arith.mulf %22, %21 : vector<2x256xf32>
    %24 = arith.addf %12, %23 : vector<2x256xf32>
    %cst_9 = arith.constant 0.159154937 : f32
    %25 = vector.broadcast %cst_9 : f32 to vector<2x256xf32>
    %26 = arith.mulf %25, %24 : vector<2x256xf32>
    %c2 = arith.constant 2 : index
    %c0_10 = arith.constant 0 : index
    %27 = vector.load %arg3[%c2, %c0_10] : memref<5x256xf32, #tpu.memory_space<vmem>>, vector<1x256xf32>
    %c3 = arith.constant 3 : index
    %c0_11 = arith.constant 0 : index
    %28 = vector.load %arg3[%c3, %c0_11] : memref<5x256xf32, #tpu.memory_space<vmem>>, vector<1x256xf32>
    %c240_i32 = arith.constant 240 : i32
    %29 = tpu.dynamic_rotate %24 by %c240_i32 dim 1 : vector<2x256xf32>, i32 -> vector<2x256xf32>
    %30 = vector.broadcast %27 : vector<1x256xf32> to vector<2x256xf32>
    %31 = arith.mulf %29, %30 : vector<2x256xf32>
    %c16_i32 = arith.constant 16 : i32
    %32 = tpu.dynamic_rotate %24 by %c16_i32 dim 1 : vector<2x256xf32>, i32 -> vector<2x256xf32>
    %33 = vector.broadcast %28 : vector<1x256xf32> to vector<2x256xf32>
    %34 = arith.mulf %32, %33 : vector<2x256xf32>
    %35 = arith.addf %31, %34 : vector<2x256xf32>
    %cst_12 = arith.constant 0.0965323522 : f32
    %36 = vector.broadcast %cst_12 : f32 to vector<2x256xf32>
    %37 = arith.mulf %36, %35 : vector<2x256xf32>
    %38 = arith.addf %26, %37 : vector<2x256xf32>
    %cst_13 = arith.constant 3.000000e-01 : f32
    %39 = vector.broadcast %cst_13 : f32 to vector<2x256xf32>
    %40 = arith.cmpf ogt, %38, %39 : vector<2x256xf32>
    %cst_14 = arith.constant 1.000000e+00 : f32
    %cst_15 = arith.constant 0.000000e+00 : f32
    %41 = vector.broadcast %cst_14 : f32 to vector<2x256xf32>
    %42 = vector.broadcast %cst_15 : f32 to vector<2x256xf32>
    %43 = arith.select %40, %41, %42 : vector<2x256xi1>, vector<2x256xf32>
    %c4 = arith.constant 4 : index
    %c0_16 = arith.constant 0 : index
    %44 = vector.load %arg3[%c4, %c0_16] : memref<5x256xf32, #tpu.memory_space<vmem>>, vector<1x256xf32>
    %45 = tpu.iota {dimensions = array<i32: 0>} : vector<2x1xi32>
    %46 = vector.broadcast %1 : i32 to vector<2x1xi32>
    %47 = arith.cmpi slt, %45, %46 : vector<2x1xi32>
    %48 = arith.extui %47 : vector<2x1xi1> to vector<2x1xi32>
    %49 = arith.sitofp %48 : vector<2x1xi32> to vector<2x1xf32>
    %50 = vector.broadcast %44 : vector<1x256xf32> to vector<2x256xf32>
    %51 = arith.mulf %43, %50 : vector<2x256xf32>
    %52 = vector.broadcast %49 : vector<2x1xf32> to vector<2x256xf32>
    %53 = arith.mulf %51, %52 : vector<2x256xf32>
    %cst_17 = arith.constant dense<0.000000e+00> : vector<2xf32>
    %54 = vector.multi_reduction <add>, %53, %cst_17 [1] : vector<2x256xf32> to vector<2xf32>
    %55 = vector.shape_cast %54 : vector<2xf32> to vector<2x1xf32>
    %c0_18 = arith.constant 0 : index
    %c0_19 = arith.constant 0 : index
    %c0_20 = arith.constant 0 : index
    %56 = vector.load %arg6[%c0_18, %c0_19, %c0_20] : memref<1x2x1xf32, #tpu.memory_space<vmem>>, vector<1x2x1xf32>
    %57 = vector.shape_cast %56 : vector<1x2x1xf32> to vector<2x1xf32>
    %58 = vector.shape_cast %55 : vector<2x1xf32> to vector<1x2x1xf32>
    tpu.vector_store %arg6[%c0_18, %c0_19, %c0_20], %58 {strides = array<i32>} : memref<1x2x1xf32, #tpu.memory_space<vmem>>, vector<1x2x1xf32>,
    %59 = vector.extract_strided_slice %53 {offsets = [0, 0], sizes = [1, 256], strides = [1, 1]} : vector<2x256xf32> to vector<1x256xf32>
    %c0_21 = arith.constant 0 : index
    %c0_22 = arith.constant 0 : index
    %c0_23 = arith.constant 0 : index
    %60 = vector.load %arg5[%c0_21, %c0_22, %c0_23] : memref<1x1x256xf32, #tpu.memory_space<vmem>>, vector<1x1x256xf32>
    %61 = vector.shape_cast %60 : vector<1x1x256xf32> to vector<1x256xf32>
    %62 = vector.shape_cast %59 : vector<1x256xf32> to vector<1x1x256xf32>
    tpu.vector_store %arg5[%c0_21, %c0_22, %c0_23], %62 {strides = array<i32>} : memref<1x1x256xf32, #tpu.memory_space<vmem>>, vector<1x1x256xf32>,
    %c0_i32 = arith.constant 0 : i32
    %63 = vector.broadcast %c0_i32 : i32 to vector<2x1xi32>
    %64 = arith.cmpi eq, %45, %63 : vector<2x1xi32>
    %cst_24 = arith.constant 1.000000e+00 : f32
    %65 = vector.shape_cast %64 : vector<2x1xi1> to vector<2x1xi1>
    %66 = vector.broadcast %65 : vector<2x1xi1> to vector<2x256xi1>
    %67 = vector.broadcast %cst_24 : f32 to vector<2x256xf32>
    %68 = arith.select %66, %67, %53 : vector<2x256xi1>, vector<2x256xf32>
    %c0_25 = arith.constant 0 : index
    %c0_26 = arith.constant 0 : index
    %c0_27 = arith.constant 0 : index
    %69 = vector.load %arg4[%c0_25, %c0_26, %c0_27] : memref<1x2x256xf32, #tpu.memory_space<vmem>>, vector<1x2x256xf32>
    %70 = vector.shape_cast %69 : vector<1x2x256xf32> to vector<2x256xf32>
    %71 = vector.shape_cast %68 : vector<2x256xf32> to vector<1x2x256xf32>
    tpu.vector_store %arg4[%c0_25, %c0_26, %c0_27], %71 {strides = array<i32>} : memref<1x2x256xf32, #tpu.memory_space<vmem>>, vector<1x2x256xf32>,
    return
  }
  func.func @transform_0(%arg0: i32, %arg1: memref<2xi32, #tpu.memory_space<smem>>) -> (i32, i32, i32, i32) {
    %c0_i32 = arith.constant 0 : i32
    %c0_i32_0 = arith.constant 0 : i32
    %c0_i32_1 = arith.constant 0 : i32
    %c0_i32_2 = arith.constant 0 : i32
    return %arg0, %c0_i32, %c0_i32_0, %c0_i32_1 : i32, i32, i32, i32
  }
  func.func @transform_1(%arg0: i32, %arg1: memref<2xi32, #tpu.memory_space<smem>>) -> (i32, i32) {
    %c0_i32 = arith.constant 0 : i32
    %c0_i32_0 = arith.constant 0 : i32
    %c0_i32_1 = arith.constant 0 : i32
    return %c0_i32, %c0_i32_0 : i32, i32
  }
  func.func @transform_2(%arg0: i32, %arg1: memref<2xi32, #tpu.memory_space<smem>>) -> (i32, i32, i32) {
    %c0_i32 = arith.constant 0 : i32
    %c0_i32_0 = arith.constant 0 : i32
    %c0_i32_1 = arith.constant 0 : i32
    return %arg0, %c0_i32, %c0_i32_0 : i32, i32, i32
  }
  func.func @transform_3(%arg0: i32, %arg1: memref<2xi32, #tpu.memory_space<smem>>) -> (i32, i32, i32) {
    %c0_i32 = arith.constant 0 : i32
    %c0_i32_0 = arith.constant 0 : i32
    %c0_i32_1 = arith.constant 0 : i32
    return %arg0, %c0_i32, %c0_i32_0 : i32, i32, i32
  }
  func.func @transform_4(%arg0: i32, %arg1: memref<2xi32, #tpu.memory_space<smem>>) -> (i32, i32, i32) {
    %c0_i32 = arith.constant 0 : i32
    %c0_i32_0 = arith.constant 0 : i32
    %c0_i32_1 = arith.constant 0 : i32
    return %arg0, %c0_i32, %c0_i32_0 : i32, i32, i32
  }
}

module attributes {stable_mosaic.version = 11 : i64} {
  func.func @kernel(%arg0: i32, %arg1: i32, %arg2: memref<2xi32, #tpu.memory_space<smem>>, %arg3: memref<1x2x256xf32, #tpu.memory_space<vmem>>, %arg4: memref<1x2x8x256xbf16, #tpu.memory_space<vmem>>, %arg5: memref<1x8x256xf32, #tpu.memory_space<vmem>>) attributes {dimension_semantics = [#tpu.dimension_semantics<parallel>, #tpu.dimension_semantics<parallel>], iteration_bounds = array<i64: 2, 1>, scalar_prefetch = 1 : i64, scratch_operands = 0 : i64, tpu.core_type = #tpu.core_type<tc>, window_params = [{transform_indices = @transform_0, window_bounds = array<i64: 1, 2, 256>}, {transform_indices = @transform_1, window_bounds = array<i64: 1, 2, 8, 256>}, {transform_indices = @transform_2, window_bounds = array<i64: 1, 8, 256>}]} {
    %0 = arith.index_cast %arg0 : i32 to index
    %1 = memref.load %arg2[%0] : memref<2xi32, #tpu.memory_space<smem>>
    %c0 = arith.constant 0 : index
    %c0_0 = arith.constant 0 : index
    %c0_1 = arith.constant 0 : index
    %2 = vector.load %arg3[%c0, %c0_0, %c0_1] : memref<1x2x256xf32, #tpu.memory_space<vmem>>, vector<1x2x256xf32>
    %3 = vector.shape_cast %2 : vector<1x2x256xf32> to vector<2x256xf32>
    %c0_2 = arith.constant 0 : index
    %c0_3 = arith.constant 0 : index
    %c0_4 = arith.constant 0 : index
    %c0_5 = arith.constant 0 : index
    %4 = vector.load %arg4[%c0_2, %c0_3, %c0_4, %c0_5] : memref<1x2x8x256xbf16, #tpu.memory_space<vmem>>, vector<1x1x8x256xbf16>
    %5 = vector.shape_cast %4 : vector<1x1x8x256xbf16> to vector<8x256xbf16>
    %6 = arith.extf %5 : vector<8x256xbf16> to vector<8x256xf32>
    %7 = arith.mulf %6, %6 : vector<8x256xf32>
    %cst = arith.constant dense<0.000000e+00> : vector<256xf32>
    %8 = vector.multi_reduction <add>, %7, %cst [0] : vector<8x256xf32> to vector<256xf32>
    %9 = vector.shape_cast %8 : vector<256xf32> to vector<1x256xf32>
    %c0_6 = arith.constant 0 : index
    %c1 = arith.constant 1 : index
    %c0_7 = arith.constant 0 : index
    %c0_8 = arith.constant 0 : index
    %10 = vector.load %arg4[%c0_6, %c1, %c0_7, %c0_8] : memref<1x2x8x256xbf16, #tpu.memory_space<vmem>>, vector<1x1x8x256xbf16>
    %11 = vector.shape_cast %10 : vector<1x1x8x256xbf16> to vector<8x256xbf16>
    %12 = arith.extf %11 : vector<8x256xbf16> to vector<8x256xf32>
    %13 = arith.mulf %6, %12 : vector<8x256xf32>
    %cst_9 = arith.constant dense<0.000000e+00> : vector<256xf32>
    %14 = vector.multi_reduction <add>, %13, %cst_9 [0] : vector<8x256xf32> to vector<256xf32>
    %15 = vector.shape_cast %14 : vector<256xf32> to vector<1x256xf32>
    %16 = tpu.concatenate %9, %15 in 0 : vector<1x256xf32>, vector<1x256xf32> -> vector<2x256xf32>
    %17 = tpu.iota {dimensions = array<i32: 0>} : vector<2x1xi32>
    %18 = vector.broadcast %1 : i32 to vector<2x1xi32>
    %19 = arith.cmpi slt, %17, %18 : vector<2x1xi32>
    %cst_10 = arith.constant 0.000000e+00 : f32
    %cst_11 = arith.constant -1.000000e+30 : f32
    %20 = vector.broadcast %cst_10 : f32 to vector<2x1xf32>
    %21 = vector.broadcast %cst_11 : f32 to vector<2x1xf32>
    %22 = arith.select %19, %20, %21 : vector<2x1xi1>, vector<2x1xf32>
    %23 = arith.mulf %3, %16 : vector<2x256xf32>
    %cst_12 = arith.constant 0.353553385 : f32
    %24 = vector.broadcast %cst_12 : f32 to vector<2x256xf32>
    %25 = arith.mulf %23, %24 : vector<2x256xf32>
    %26 = vector.broadcast %22 : vector<2x1xf32> to vector<2x256xf32>
    %27 = arith.addf %25, %26 : vector<2x256xf32>
    %cst_13 = arith.constant dense<0xFF800000> : vector<256xf32>
    %28 = vector.multi_reduction <maximumf>, %27, %cst_13 [0] : vector<2x256xf32> to vector<256xf32>
    %29 = vector.shape_cast %28 : vector<256xf32> to vector<1x256xf32>
    %30 = vector.broadcast %29 : vector<1x256xf32> to vector<2x256xf32>
    %31 = arith.subf %27, %30 : vector<2x256xf32>
    %32 = math.exp %31 : vector<2x256xf32>
    %cst_14 = arith.constant dense<0.000000e+00> : vector<256xf32>
    %33 = vector.multi_reduction <add>, %32, %cst_14 [0] : vector<2x256xf32> to vector<256xf32>
    %34 = vector.shape_cast %33 : vector<256xf32> to vector<1x256xf32>
    %35 = tpu.reciprocal %34 {approx = true} : vector<1x256xf32> -> vector<1x256xf32>
    %36 = vector.broadcast %35 : vector<1x256xf32> to vector<2x256xf32>
    %37 = arith.mulf %32, %36 : vector<2x256xf32>
    %38 = arith.mulf %37, %3 : vector<2x256xf32>
    %39 = vector.extract_strided_slice %38 {offsets = [0, 0], sizes = [1, 256], strides = [1, 1]} : vector<2x256xf32> to vector<1x256xf32>
    %40 = vector.broadcast %39 : vector<1x256xf32> to vector<8x256xf32>
    %41 = arith.mulf %40, %6 : vector<8x256xf32>
    %c0_15 = arith.constant 0 : index
    %c1_16 = arith.constant 1 : index
    %c0_17 = arith.constant 0 : index
    %c0_18 = arith.constant 0 : index
    %42 = vector.load %arg4[%c0_15, %c1_16, %c0_17, %c0_18] : memref<1x2x8x256xbf16, #tpu.memory_space<vmem>>, vector<1x1x8x256xbf16>
    %43 = vector.shape_cast %42 : vector<1x1x8x256xbf16> to vector<8x256xbf16>
    %44 = arith.extf %43 : vector<8x256xbf16> to vector<8x256xf32>
    %45 = vector.extract_strided_slice %38 {offsets = [1, 0], sizes = [1, 256], strides = [1, 1]} : vector<2x256xf32> to vector<1x256xf32>
    %46 = vector.broadcast %45 : vector<1x256xf32> to vector<8x256xf32>
    %47 = arith.mulf %46, %44 : vector<8x256xf32>
    %48 = arith.addf %41, %47 : vector<8x256xf32>
    %c0_19 = arith.constant 0 : index
    %c0_20 = arith.constant 0 : index
    %c0_21 = arith.constant 0 : index
    %49 = vector.load %arg5[%c0_19, %c0_20, %c0_21] : memref<1x8x256xf32, #tpu.memory_space<vmem>>, vector<1x8x256xf32>
    %50 = vector.shape_cast %49 : vector<1x8x256xf32> to vector<8x256xf32>
    %51 = vector.shape_cast %48 : vector<8x256xf32> to vector<1x8x256xf32>
    tpu.vector_store %arg5[%c0_19, %c0_20, %c0_21], %51 {strides = array<i32>} : memref<1x8x256xf32, #tpu.memory_space<vmem>>, vector<1x8x256xf32>,
    return
  }
  func.func @transform_0(%arg0: i32, %arg1: i32, %arg2: memref<2xi32, #tpu.memory_space<smem>>) -> (i32, i32, i32) {
    %c0_i32 = arith.constant 0 : i32
    %c0_i32_0 = arith.constant 0 : i32
    return %arg0, %c0_i32, %arg1 : i32, i32, i32
  }
  func.func @transform_1(%arg0: i32, %arg1: i32, %arg2: memref<2xi32, #tpu.memory_space<smem>>) -> (i32, i32, i32, i32) {
    %c0_i32 = arith.constant 0 : i32
    %c0_i32_0 = arith.constant 0 : i32
    %c0_i32_1 = arith.constant 0 : i32
    return %arg0, %c0_i32, %c0_i32_0, %arg1 : i32, i32, i32, i32
  }
  func.func @transform_2(%arg0: i32, %arg1: i32, %arg2: memref<2xi32, #tpu.memory_space<smem>>) -> (i32, i32, i32) {
    %c0_i32 = arith.constant 0 : i32
    %c0_i32_0 = arith.constant 0 : i32
    return %arg0, %c0_i32, %arg1 : i32, i32, i32
  }
}

</mosaic_0001>

<llo_original>
// kernel: squeeze.3
$region0: #{squeeze.3}
  %s0 = inlined_call_operand.vmem [shape: f32[256], index: 0, kind: input, shape index: {}]
  %s1 = inlined_call_operand.hbm [shape: f32[1,1,16,16], index: 1, kind: output, shape index: {}]
  $region1: #{squeeze.3} parent=0
    #allocation0 [shape = 'u8[8192]{0}', space=vmem, size = 0x2000, scoped, tag = 'operand span for operand 1']
    #allocation1 [shape = 's32[1]{0}', space=sflag, size = 0x4, scoped, tag = 'scoped memory for squeeze.3']
    #allocation2 [shape = 'u8[4096]{0}', space=vmem, size = 0x1000, scoped, tag = 'scoped mem for input reshape']
    %2 = vsyncpa [#allocation1], 0
    %s4 = sshllo.u32 0, 2
    %v5 = vld [vmem:[%s0] sm:%s4]
    %6 = vst [vmem:[#allocation2] sm:%s4] %v5
    %v7 = vld [vmem:[#allocation2] sm:$0x3]
    %vm8 = vcmask 130048
    %9 = vst.msk [vmem:[#allocation0] ss:$8 sm:$0x3] %vm8, %v7
    %v10 = vld [vmem:[#allocation2] sm:$0x3]
    %11 = vrot.lane.b32.xlu0 %v10, 112
    %v12 = vpop.permute.xlu0 %11
    %vm13 = vcmask 130048
    %s14 = scalar_lea.vmem [#allocation0], 1
    %15 = vst.msk [vmem:[%s14] ss:$8 sm:$0x3] %vm13, %v12
    %v16 = vld [vmem:[#allocation2] sm:$0x3]
    %17 = vrot.lane.b32.xlu0 %v16, 96
    %v18 = vpop.permute.xlu0 %17
    %vm19 = vcmask 130048
    %s20 = scalar_lea.vmem [#allocation0], 2
    %21 = vst.msk [vmem:[%s20] ss:$8 sm:$0x3] %vm19, %v18
    %v22 = vld [vmem:[#allocation2] sm:$0x3]
    %23 = vrot.lane.b32.xlu0 %v22, 80
    %v24 = vpop.permute.xlu0 %23
    %vm25 = vcmask 130048
    %s26 = scalar_lea.vmem [#allocation0], 3
    %27 = vst.msk [vmem:[%s26] ss:$8 sm:$0x3] %vm25, %v24
    %v28 = vld [vmem:[#allocation2] sm:$0x3]
    %29 = vrot.lane.b32.xlu0 %v28, 64
    %v30 = vpop.permute.xlu0 %29
    %vm31 = vcmask 130048
    %s32 = scalar_lea.vmem [#allocation0], 4
    %33 = vst.msk [vmem:[%s32] ss:$8 sm:$0x3] %vm31, %v30
    %v34 = vld [vmem:[#allocation2] sm:$0x3]
    %35 = vrot.lane.b32.xlu0 %v34, 48
    %v36 = vpop.permute.xlu0 %35
    %vm37 = vcmask 130048
    %s38 = scalar_lea.vmem [#allocation0], 5
    %39 = vst.msk [vmem:[%s38] ss:$8 sm:$0x3] %vm37, %v36
    %v40 = vld [vmem:[#allocation2] sm:$0x3]
    %41 = vrot.lane.b32.xlu0 %v40, 32
    %v42 = vpop.permute.xlu0 %41
    %vm43 = vcmask 130048
    %s44 = scalar_lea.vmem [#allocation0], 6
    %45 = vst.msk [vmem:[%s44] ss:$8 sm:$0x3] %vm43, %v42
    %v46 = vld [vmem:[#allocation2] sm:$0x3]
    %47 = vrot.lane.b32.xlu0 %v46, 16
    %v48 = vpop.permute.xlu0 %47
    %vm49 = vcmask 130048
    %s50 = scalar_lea.vmem [#allocation0], 7
    %51 = vst.msk [vmem:[%s50] ss:$8 sm:$0x3] %vm49, %v48
    %s53 = ssub.s32 256, 256
    %54 = vsyncadd [#allocation1], %s53
    %s56 = sshll.u32 [#allocation0], 4
    %s57 = int_to_ptr.vmem [resolvable:$true] %s56
    %59 = dma.vmem_to_hbm [thread:$0]  %s57, 256, %s1, [#allocation1]
    %60 = dma.done [#allocation1], 256
    %61 = vsyncpa [#allocation1], 1

// kernel: fwd.2
$region0: #{fwd.2}
  #allocation0 [shape = 'u32[]', space=smem, size = 0x4, offset = 0x4, fixed_abs, tag = 'smem constant byte address 0x4 - core index']
  #allocation1 [shape = 'u32[144,128]{1,0:T(1,128)}', space=vmem, size = 0x12000, scoped, tag = 'internal scratch']
  #allocation2 [shape = 's32[1]{0}', space=sflag, size = 0x4, scoped, tag = 'scoped memory for fwd.2']
  #allocation3 [shape = 'u8[512]{0}', space=smem, size = 0x200, scoped, tag = 'prefetched SMEM operand 0']
  %s0 = inlined_call_operand.vmem [shape: s32[2], index: 0, kind: input, shape index: {}]
  %s1 = inlined_call_operand.vmem [shape: bf16[2,2,2,256], index: 1, kind: input, shape index: {}]
  %s2 = inlined_call_operand.vmem [shape: f32[5,256], index: 2, kind: input, shape index: {}]
  %s3 = inlined_call_operand.vmem [shape: f32[2,2,256], index: 3, kind: output, shape index: {0}]
  %s4 = inlined_call_operand.vmem [shape: f32[2,1,256], index: 4, kind: output, shape index: {1}]
  %s5 = inlined_call_operand.vmem [shape: f32[2,2,1], index: 5, kind: output, shape index: {2}]
  %6 = xla_tuple %s3, %s4, %s5
  %s7 = sld [smem:[#allocation0]]
  $region57: #{fwd.2} parent=0
    _
  %s9 = ssub.s32 1, %s7
  %s10 = scalar_select 0, %s9, %s7
  %s11 = sshll.u32 %s0, 4
  %s12 = int_to_ptr.vmem [resolvable:$true] %s11
  %14 = dma.vmem_to_smem %s12, 16, [#allocation3], [#allocation2]
  %15 = dma.done [#allocation2], 16
  %16 = sfence
  loop: start=0, step=1, limit=4
  $region2: #{fwd.2} parent=0 // loop_pre_header
    _
  $region3: #{fwd.2} parent=0 // loop_header
    %s18 = sphi 0, %s22
    %p19 = scmp.ge.s32.totalorder %s18, 4
    %s28 = sphi 0, %s30
    %s31 = sphi 0, %s28
    %s32 = sphi 0, %s31
    %s48 = sphi 0, %s32
    %s52 = sphi 0, %s52
    %s54 = sphi 0, %s52
    %s55 = sphi 0, %s54
    %s69 = sphi 0, %s55
    %s75 = sphi 0, %s77
    %s78 = sphi 0, %s75
    %s79 = sphi 0, %s78
    %s95 = sphi 0, %s79
    %s101 = sphi 0, %s103
    %s104 = sphi 0, %s101
    %s105 = sphi 0, %s104
    %s121 = sphi 0, %s105
    %s127 = sphi 0, %s129
    %s130 = sphi 0, %s127
    %s131 = sphi 0, %s130
    %s147 = sphi 0, %s131
  $region4: #{fwd.2} parent=0 // loop_header_branch
    %21 = sbr.rel (%p19) target = $region8
  $region5: #{fwd.2} parent=0 // loop_body
    %s23 = ssub.s32 %s18, 1
    %s24 = ssub.s32 %s18, 2
    %s25 = sadd.s32 %s18, 1
    %s26 = ssub.s32 %s18, %s25
    %p27 = scmp.eq.s32.totalorder %s26, 0
    %s29 = sadd.s32 %s28, 1
    %s30 = scalar_select %p27, %s28, %s29
    %p33 = pneg %p27
    %p34 = scmp.eq.s32.totalorder %s18, 1
    %p35 = por %p33, %p34
    %p36 = scmp.ne.s32.totalorder %s28, %s31
    %p37 = scmp.eq.s32.totalorder %s18, 0
    %p38 = por %p36, %p37
    %p39 = scmp.ne.s32.totalorder %s28, %s31
    %p40 = scmp.eq.s32.totalorder %s23, 1
    %p41 = por %p39, %p40
    %p42 = scmp.ne.s32.totalorder %s31, %s32
    %p43 = scmp.eq.s32.totalorder %s23, 0
    %p44 = por %p42, %p43
    %p45 = scmp.ne.s32.totalorder %s31, %s32
    %p46 = scmp.eq.s32.totalorder %s24, 1
    %p47 = por %p45, %p46
    %p49 = scmp.ne.s32.totalorder %s32, %s48
    %p50 = scmp.eq.s32.totalorder %s24, 0
    %p51 = por %p49, %p50
    %s53 = sadd.s32 %s52, 1
    %p56 = scmp.eq.s32.totalorder %s18, 1
    %p57 = scmp.ne.s32.totalorder %s52, %s54
    %p58 = scmp.eq.s32.totalorder %s18, 0
    %p59 = por %p57, %p58
    %p60 = scmp.ne.s32.totalorder %s52, %s54
    %p61 = scmp.eq.s32.totalorder %s23, 1
    %p62 = por %p60, %p61
    %p63 = scmp.ne.s32.totalorder %s54, %s55
    %p64 = scmp.eq.s32.totalorder %s23, 0
    %p65 = por %p63, %p64
    %p66 = scmp.ne.s32.totalorder %s54, %s55
    %p67 = scmp.eq.s32.totalorder %s24, 1
    %p68 = por %p66, %p67
    %p70 = scmp.ne.s32.totalorder %s55, %s69
    %p71 = scmp.eq.s32.totalorder %s24, 0
    %p72 = por %p70, %p71
    %s73 = ssub.s32 %s18, %s25
    %p74 = scmp.eq.s32.totalorder %s73, 0
    %s76 = sadd.s32 %s75, 1
    %s77 = scalar_select %p74, %s75, %s76
    %p80 = pneg %p74
    %p81 = scmp.eq.s32.totalorder %s18, 1
    %p82 = por %p80, %p81
    %p83 = scmp.ne.s32.totalorder %s75, %s78
    %p84 = scmp.eq.s32.totalorder %s18, 0
    %p85 = por %p83, %p84
    %p86 = scmp.ne.s32.totalorder %s75, %s78
    %p87 = scmp.eq.s32.totalorder %s23, 1
    %p88 = por %p86, %p87
    %p89 = scmp.ne.s32.totalorder %s78, %s79
    %p90 = scmp.eq.s32.totalorder %s23, 0
    %p91 = por %p89, %p90
    %p92 = scmp.ne.s32.totalorder %s78, %s79
    %p93 = scmp.eq.s32.totalorder %s24, 1
    %p94 = por %p92, %p93
    %p96 = scmp.ne.s32.totalorder %s79, %s95
    %p97 = scmp.eq.s32.totalorder %s24, 0
    %p98 = por %p96, %p97
    %s99 = ssub.s32 %s18, %s25
    %p100 = scmp.eq.s32.totalorder %s99, 0
    %s102 = sadd.s32 %s101, 1
    %s103 = scalar_select %p100, %s101, %s102
    %p106 = pneg %p100
    %p107 = scmp.eq.s32.totalorder %s18, 1
    %p108 = por %p106, %p107
    %p109 = scmp.ne.s32.totalorder %s101, %s104
    %p110 = scmp.eq.s32.totalorder %s18, 0
    %p111 = por %p109, %p110
    %p112 = scmp.ne.s32.totalorder %s101, %s104
    %p113 = scmp.eq.s32.totalorder %s23, 1
    %p114 = por %p112, %p113
    %p115 = scmp.ne.s32.totalorder %s104, %s105
    %p116 = scmp.eq.s32.totalorder %s23, 0
    %p117 = por %p115, %p116
    %p118 = scmp.ne.s32.totalorder %s104, %s105
    %p119 = scmp.eq.s32.totalorder %s24, 1
    %p120 = por %p118, %p119
    %p122 = scmp.ne.s32.totalorder %s105, %s121
    %p123 = scmp.eq.s32.totalorder %s24, 0
    %p124 = por %p122, %p123
    %s125 = ssub.s32 %s18, %s25
    %p126 = scmp.eq.s32.totalorder %s125, 0
    %s128 = sadd.s32 %s127, 1
    %s129 = scalar_select %p126, %s127, %s128
    %p132 = pneg %p126
    %p133 = scmp.eq.s32.totalorder %s18, 1
    %p134 = por %p132, %p133
    %p135 = scmp.ne.s32.totalorder %s127, %s130
    %p136 = scmp.eq.s32.totalorder %s18, 0
    %p137 = por %p135, %p136
    %p138 = scmp.ne.s32.totalorder %s127, %s130
    %p139 = scmp.eq.s32.totalorder %s23, 1
    %p140 = por %p138, %p139
    %p141 = scmp.ne.s32.totalorder %s130, %s131
    %p142 = scmp.eq.s32.totalorder %s23, 0
    %p143 = por %p141, %p142
    %p144 = scmp.ne.s32.totalorder %s130, %s131
    %p145 = scmp.eq.s32.totalorder %s24, 1
    %p146 = por %p144, %p145
    %p148 = scmp.ne.s32.totalorder %s131, %s147
    %p149 = scmp.eq.s32.totalorder %s24, 0
    %p150 = por %p148, %p149
    %p151 = scmp.le.s32.totalorder 1, %s18
    %p152 = scmp.lt.s32.totalorder %s18, 3
    %p153 = pnand %p151, %p152
    %p154 = pneg %p153
    // Predicated region
    $region9: #{fwd.2} parent=5 // pred_check
      _
    $region10: #{fwd.2} parent=5 // pred_check_branch
      %156 = sbr.rel (%p153) target = $region12
    $region11: #{fwd.2} parent=5 // pred_region
      %s157 = ssub.s32 %s18, 1
      // Predicated region
      $region13: #{fwd.2} parent=11 // pred_check
        %p158 = pneg %p65
      $region14: #{fwd.2} parent=11 // pred_check_branch
        %160 = sbr.rel (%p158) target = $region16
      $region15: #{fwd.2} parent=11 // pred_region
        _
      $region16: #{fwd.2} parent=11 // pred_fallthru
        _
    $region12: #{fwd.2} parent=5 // pred_fallthru
      _
    %p161 = scmp.lt.s32.totalorder %s18, 2
    // Predicated region
    $region17: #{fwd.2} parent=5 // pred_check
      %p162 = pneg %p161
    $region18: #{fwd.2} parent=5 // pred_check_branch
      %164 = sbr.rel (%p162) target = $region20
    $region19: #{fwd.2} parent=5 // pred_region
      // Predicated region
      $region21: #{fwd.2} parent=19 // pred_check
        %p165 = pneg %p38
      $region22: #{fwd.2} parent=19 // pred_check_branch
        %167 = sbr.rel (%p165) target = $region24
      $region23: #{fwd.2} parent=19 // pred_region
        %p168 = scmp.lt.s32.totalorder %s18, 1
        %s169 = scalar_select %p168, %s18, 1
        %s170 = smul.addr %s169, 4
        %s171 = scalar_lea.vmem %s1, %s170
      $region24: #{fwd.2} parent=19 // pred_fallthru
        _
    $region20: #{fwd.2} parent=5 // pred_fallthru
      _
    %p172 = scmp.le.s32.totalorder 1, %s18
    %p173 = scmp.lt.s32.totalorder %s18, 3
    %p174 = pnand %p172, %p173
    %p175 = pneg %p174
    // Predicated region
    $region25: #{fwd.2} parent=5 // pred_check
      _
    $region26: #{fwd.2} parent=5 // pred_check_branch
      %177 = sbr.rel (%p174) target = $region28
    $region27: #{fwd.2} parent=5 // pred_region
      %s178 = ssub.s32 %s18, 1
      %p179 = scmp.lt.s32.totalorder %s23, 1
      %s180 = scalar_select %p179, %s23, 1
      %s181 = smul.addr %s180, 4
      %s182 = scalar_lea.vmem %s1, %s181
      %p183 = pneg %p44
      %p184 = pneg %p41
      %p185 = pneg %p65
      %p186 = pneg %p62
      %p187 = pneg %p91
      %p188 = pneg %p88
      %p189 = scmp.lt.s32.totalorder %s23, 1
      %s190 = scalar_select %p189, %s23, 1
      %s191 = smul.addr %s190, 2
      %s192 = smul.addr %s191, 2
      %s193 = scalar_lea.vmem %s3, %s192
      %p194 = pneg %p117
      %p195 = pneg %p114
      %p196 = scmp.lt.s32.totalorder %s23, 1
      %s197 = scalar_select %p196, %s23, 1
      %s198 = smul.addr %s197, 2
      %s199 = scalar_lea.vmem %s4, %s198
      %p200 = pneg %p143
      %p201 = pneg %p140
      %p202 = scmp.lt.s32.totalorder %s23, 1
      %s203 = scalar_select %p202, %s23, 1
      %s204 = smul.addr %s203, 2
      %s205 = scalar_lea.vmem %s5, %s204
      %p206 = scmp.lt.s32.totalorder %s23, 1
      %s207 = scalar_select %p206, %s23, 1
      %s208 = smul.addr %s207, 4
      %s209 = scalar_lea.vmem %s1, %s208
      %p210 = scmp.lt.s32.totalorder %s23, 1
      %s211 = scalar_select %p210, %s23, 1
      %s212 = smul.addr %s211, 2
      %s213 = smul.addr %s212, 2
      %s214 = scalar_lea.vmem %s3, %s213
      %p215 = scmp.lt.s32.totalorder %s23, 1
      %s216 = scalar_select %p215, %s23, 1
      %s217 = smul.addr %s216, 2
      %s218 = scalar_lea.vmem %s4, %s217
      %p219 = scmp.lt.s32.totalorder %s23, 1
      %s220 = scalar_select %p219, %s23, 1
      %s221 = smul.addr %s220, 2
      %s222 = scalar_lea.vmem %s5, %s221
      %s223 = sld [smem:[#allocation3 + %s23]]
      %v224 = vld [vmem:[%s209] sm:$0x3]
      %v225 = vld [vmem:[%s209 + $0x2] sm:$0x3]
      %v226 = vunpack.c.l.bf16 %v224
      %v227 = vunpack.c.l.bf16 %v225
      %v228 = vxor.u32 %v226, 2147483648
      %v229 = vxor.u32 %v227, 2147483648
      %v230 = vmul.f32 %v228, 1.442695
      %v231 = vpow.pop %v230
      %v232 = vmul.f32 %v229, 1.442695
      %v233 = vpow.pop %v232
      %v234 = vadd.f32 %v231, 1.0
      %v235 = vadd.f32 %v233, 1.0
      %v236 = vrcp.pop %v234
      %v237 = vmul.f32 1.0, %v236
      %v238 = vrcp.pop %v235
      %v239 = vmul.f32 1.0, %v238
      %v243 = vunpack.c.l.s4 1983009808
      %v244 = vunpack.c.0.s8 %v243
      %v245 = vlaneseq
      %v246 = vshrl.u32 %v245, 7
      %v247 = vsub.s32 %v244, %v246
      %v248 = vrot.slane %v237, %v247
      %v249 = vcombine.high %v248, %v248
      %v251 = vunpack.c.l.s4 1983009808
      %v252 = vunpack.c.0.s8 %v251
      %v253 = vlaneseq
      %v254 = vshrl.u32 %v253, 7
      %v255 = vsub.s32 %v252, %v254
      %v256 = vrot.slane %v239, %v255
      %v257 = vcombine.high %v256, %v256
      %vm262 = vcmask 1041408
      %v263 = vsel %vm262, %v248, -inf
      %v264 = vrot.slane %v263, 4
      %v265 = vmax.f32 %v263, %v264
      %v266 = vrot.slane %v265, 2
      %v267 = vmax.f32 %v265, %v266
      %v268 = vrot.slane %v267, 1
      %v269 = vmax.f32 %v267, %v268
      %v270 = vsel %vm262, %v249, -inf
      %v271 = vrot.slane %v270, 4
      %v272 = vmax.f32 %v270, %v271
      %v273 = vrot.slane %v272, 2
      %v274 = vmax.f32 %v272, %v273
      %v275 = vrot.slane %v274, 1
      %v276 = vmax.f32 %v274, %v275
      %v277 = vsel %vm262, %v256, -inf
      %v278 = vrot.slane %v277, 4
      %v279 = vmax.f32 %v277, %v278
      %v280 = vrot.slane %v279, 2
      %v281 = vmax.f32 %v279, %v280
      %v282 = vrot.slane %v281, 1
      %v283 = vmax.f32 %v281, %v282
      %v284 = vsel %vm262, %v257, -inf
      %v285 = vrot.slane %v284, 4
      %v286 = vmax.f32 %v284, %v285
      %v287 = vrot.slane %v286, 2
      %v288 = vmax.f32 %v286, %v287
      %v289 = vrot.slane %v288, 1
      %v290 = vmax.f32 %v288, %v289
      %v291 = vld [vmem:[%s2] ss:$8 sm:$0x3]
      %s292 = scalar_lea.vmem %s2, 1
      %v293 = vld [vmem:[%s292] ss:$8 sm:$0x3]
      %vm298 = vcmask 1041409
      %v299 = vsel %vm298, %v283, %v269
      %v300 = vsel %vm298, %v290, %v276
      %303 = vrot.lane.b32.xlu0 %v299, 127
      %v304 = vpop.permute.xlu0 %303
      %305 = vrot.lane.b32.xlu0 %v300, 127
      %v306 = vpop.permute.xlu0 %305
      %v307 = vlaneseq
      %v308 = vand.u32 %v307, 127
      %vm309 = vcmp.lt.s32.totalorder %v308, 127
      %v310 = vsel %vm309, %v304, %v306
      %v311 = vsel %vm309, %v306, %v304
      %v313 = vlaneseq
      %v314 = vshrl.u32 %v313, 7
      %v315 = vsub.s32 0, %v314
      %v316 = vrot.slane %v291, %v315
      %v317 = vlaneseq
      %v318 = vshrl.u32 %v317, 7
      %v319 = vsub.s32 1, %v318
      %v320 = vrot.slane %v291, %v319
      %v323 = vmul.f32 %v310, %v316
      %v324 = vmul.f32 %v311, %v320
      %325 = vrot.lane.b32.xlu0 %v299, 1
      %v326 = vpop.permute.xlu0 %325
      %327 = vrot.lane.b32.xlu0 %v300, 1
      %v328 = vpop.permute.xlu0 %327
      %vm329 = vcmp.lt.s32.totalorder %v308, 1
      %v330 = vsel %vm329, %v326, %v328
      %v331 = vsel %vm329, %v328, %v326
      %v333 = vlaneseq
      %v334 = vshrl.u32 %v333, 7
      %v335 = vsub.s32 0, %v334
      %v336 = vrot.slane %v293, %v335
      %v337 = vlaneseq
      %v338 = vshrl.u32 %v337, 7
      %v339 = vsub.s32 1, %v338
      %v340 = vrot.slane %v293, %v339
      %v343 = vmul.f32 %v331, %v336
      %v344 = vmul.f32 %v330, %v340
      %v345 = vadd.f32 %v323, %v343
      %v346 = vadd.f32 %v324, %v344
      %v347 = vmul.f32 %v345, 0.60653067
      %v348 = vmul.f32 %v346, 0.60653067
      %v351 = vrot.slane %v347, 1
      %v352 = vrot.slane %v348, 1
      %v357 = vadd.f32 %v269, %v347
      %v358 = vadd.f32 %v276, %v348
      %v359 = vadd.f32 %v283, %v351
      %v360 = vadd.f32 %v290, %v352
      %v361 = vmul.f32 %v357, 0.15915494
      %v362 = vmul.f32 %v358, 0.15915494
      %v363 = vmul.f32 %v359, 0.15915494
      %v364 = vmul.f32 %v360, 0.15915494
      %s365 = scalar_lea.vmem %s2, 2
      %v366 = vld [vmem:[%s365] ss:$8 sm:$0x3]
      %s367 = scalar_lea.vmem %s2, 3
      %v368 = vld [vmem:[%s367] ss:$8 sm:$0x3]
      %v373 = vrot.slane %v359, 7
      %v374 = vsel %vm298, %v373, %v357
      %v375 = vrot.slane %v360, 7
      %v376 = vsel %vm298, %v375, %v358
      %379 = vrot.lane.b32.xlu0 %v374, 112
      %v380 = vpop.permute.xlu0 %379
      %381 = vrot.lane.b32.xlu0 %v376, 112
      %v382 = vpop.permute.xlu0 %381
      %vm383 = vcmp.lt.s32.totalorder %v308, 112
      %v384 = vsel %vm383, %v380, %v382
      %v385 = vsel %vm383, %v382, %v380
      %v387 = vlaneseq
      %v388 = vshrl.u32 %v387, 7
      %v389 = vsub.s32 0, %v388
      %v390 = vrot.slane %v366, %v389
      %v391 = vlaneseq
      %v392 = vshrl.u32 %v391, 7
      %v393 = vsub.s32 1, %v392
      %v394 = vrot.slane %v366, %v393
      %v397 = vmul.f32 %v384, %v390
      %v398 = vmul.f32 %v385, %v394
      %399 = vrot.lane.b32.xlu0 %v374, 16
      %v400 = vpop.permute.xlu0 %399
      %401 = vrot.lane.b32.xlu0 %v376, 16
      %v402 = vpop.permute.xlu0 %401
      %vm403 = vcmp.lt.s32.totalorder %v308, 16
      %v404 = vsel %vm403, %v400, %v402
      %v405 = vsel %vm403, %v402, %v400
      %v407 = vlaneseq
      %v408 = vshrl.u32 %v407, 7
      %v409 = vsub.s32 0, %v408
      %v410 = vrot.slane %v368, %v409
      %v411 = vlaneseq
      %v412 = vshrl.u32 %v411, 7
      %v413 = vsub.s32 1, %v412
      %v414 = vrot.slane %v368, %v413
      %v417 = vmul.f32 %v405, %v410
      %v418 = vmul.f32 %v404, %v414
      %v419 = vadd.f32 %v397, %v417
      %v420 = vadd.f32 %v398, %v418
      %v421 = vmul.f32 %v419, 0.09653235
      %v422 = vmul.f32 %v420, 0.09653235
      %v425 = vrot.slane %v421, 1
      %v426 = vrot.slane %v422, 1
      %v431 = vadd.f32 %v361, %v421
      %v432 = vadd.f32 %v362, %v422
      %v433 = vadd.f32 %v363, %v425
      %v434 = vadd.f32 %v364, %v426
      %vm435 = vcmp.gt.f32.partialorder %v431, 0.3
      %vm436 = vcmp.gt.f32.partialorder %v432, 0.3
      %vm437 = vcmp.gt.f32.partialorder %v433, 0.3
      %vm438 = vcmp.gt.f32.partialorder %v434, 0.3
      %v439 = vsel %vm435, 1.0, 0.0
      %v440 = vsel %vm436, 1.0, 0.0
      %v441 = vsel %vm437, 1.0, 0.0
      %v442 = vsel %vm438, 1.0, 0.0
      %s443 = scalar_lea.vmem %s2, 4
      %v444 = vld [vmem:[%s443] ss:$8 sm:$0x3]
      %v445 = vlaneseq
      %v446 = vshrl.u32 %v445, 7
      %v447 = vstv %s223
      %vm448 = vcmp.lt.s32.totalorder %v446, %v447
      %v449 = vsel %vm448, 1, 0
      %v450 = vcvt.s32.f32 %v449
      %v452 = vlaneseq
      %v453 = vshrl.u32 %v452, 7
      %v454 = vsub.s32 0, %v453
      %v455 = vrot.slane %v444, %v454
      %v456 = vlaneseq
      %v457 = vshrl.u32 %v456, 7
      %v458 = vsub.s32 1, %v457
      %v459 = vrot.slane %v444, %v458
      %v462 = vmul.f32 %v439, %v455
      %v463 = vmul.f32 %v440, %v459
      %v464 = vmul.f32 %v441, %v455
      %v465 = vmul.f32 %v442, %v459
      %v467 = vrot.slane %v450, 1
      %v470 = vmul.f32 %v462, %v450
      %v471 = vmul.f32 %v463, %v450
      %v472 = vmul.f32 %v464, %v467
      %v473 = vmul.f32 %v465, %v467
      %v478 = vrot.slane %v472, 7
      %v479 = vsel %vm298, %v478, %v470
      %v480 = vrot.slane %v473, 7
      %v481 = vsel %vm298, %v480, %v471
      %v484 = vsel %vm262, %v479, 0.0
      %v485 = vsel %vm262, %v481, 0.0
      %v486 = vadd.f32 %v484, %v485
      %487 = vadd.xlane.f32.xlu0 %v486
      %v488 = vpop.xlane.xlu0 %487
      %vm489 = vcmask 1024
      %490 = vst.msk [vmem:[%s222] sm:$0x3] %vm489, %v488
      %v491 = vcombine.low %v470, %v471
      %v493 = vunpack.c.l.s4 1966171168
      %v494 = vunpack.c.0.s8 %v493
      %v495 = vlaneseq
      %v496 = vshrl.u32 %v495, 7
      %v497 = vsub.s32 %v494, %v496
      %v498 = vrot.slane %v491, %v497
      %v500 = vunpack.c.l.s4 1966171168
      %v501 = vunpack.c.0.s8 %v500
      %v502 = vlaneseq
      %v503 = vshrl.u32 %v502, 7
      %v504 = vsub.s32 %v501, %v503
      %v505 = vrot.slane %v498, %v504
      %v507 = vlaneseq
      %vm508 = vcmp.ge.s32.totalorder %v507, 0
      %vm509 = vcmp.lt.s32.totalorder %v507, 256
      %vm510 = vmand %vm508, %vm509
      %511 = vst.msk [vmem:[%s218] sm:$0x3] %vm510, %v505
      %vm512 = vcmp.eq.s32.totalorder %v446, 0
      %v513 = vsel %vm512, 1, 0
      %vm514 = vcmp.eq.s32.totalorder %v513, 1
      %v515 = vsel %vm514, 1.0, %v479
      %v516 = vsel %vm514, 1.0, %v481
      %v519 = vcombine.low %v515, %v516
      %v521 = vunpack.c.l.s4 1983009808
      %v522 = vunpack.c.0.s8 %v521
      %v523 = vlaneseq
      %v524 = vshrl.u32 %v523, 7
      %v525 = vsub.s32 %v522, %v524
      %v526 = vrot.slane %v519, %v525
      %528 = vst [vmem:[%s214] sm:$0xf] %v526
      %p529 = scmp.lt.s32.totalorder %s23, 1
      %s530 = scalar_select %p529, %s23, 1
      %s531 = smul.addr %s530, 2
      %s532 = smul.addr %s531, 2
      %s533 = scalar_lea.vmem %s3, %s532
      %p534 = scmp.lt.s32.totalorder %s23, 1
      %s535 = scalar_select %p534, %s23, 1
      %s536 = smul.addr %s535, 2
      %s537 = scalar_lea.vmem %s4, %s536
      %p538 = scmp.lt.s32.totalorder %s23, 1
      %s539 = scalar_select %p538, %s23, 1
      %s540 = smul.addr %s539, 2
      %s541 = scalar_lea.vmem %s5, %s540
      // Predicated region
      $region29: #{fwd.2} parent=27 // pred_check
        %p542 = pneg %p88
      $region30: #{fwd.2} parent=27 // pred_check_branch
        %544 = sbr.rel (%p542) target = $region32
      $region31: #{fwd.2} parent=27 // pred_region
        _
      $region32: #{fwd.2} parent=27 // pred_fallthru
        _
      // Predicated region
      $region33: #{fwd.2} parent=27 // pred_check
        %p545 = pneg %p114
      $region34: #{fwd.2} parent=27 // pred_check_branch
        %547 = sbr.rel (%p545) target = $region36
      $region35: #{fwd.2} parent=27 // pred_region
        _
      $region36: #{fwd.2} parent=27 // pred_fallthru
        _
      // Predicated region
      $region37: #{fwd.2} parent=27 // pred_check
        %p548 = pneg %p140
      $region38: #{fwd.2} parent=27 // pred_check_branch
        %550 = sbr.rel (%p548) target = $region40
      $region39: #{fwd.2} parent=27 // pred_region
        _
      $region40: #{fwd.2} parent=27 // pred_fallthru
        _
    $region28: #{fwd.2} parent=5 // pred_fallthru
      _
    %p551 = scmp.le.s32.totalorder 2, %s18
    // Predicated region
    $region41: #{fwd.2} parent=5 // pred_check
      %p552 = pneg %p551
    $region42: #{fwd.2} parent=5 // pred_check_branch
      %554 = sbr.rel (%p552) target = $region44
    $region43: #{fwd.2} parent=5 // pred_region
      %s555 = ssub.s32 %s18, 2
      // Predicated region
      $region45: #{fwd.2} parent=43 // pred_check
        %p556 = pneg %p94
      $region46: #{fwd.2} parent=43 // pred_check_branch
        %558 = sbr.rel (%p556) target = $region48
      $region47: #{fwd.2} parent=43 // pred_region
        %p559 = scmp.lt.s32.totalorder %s24, 1
        %s560 = scalar_select %p559, %s24, 1
        %s561 = smul.addr %s560, 2
        %s562 = smul.addr %s561, 2
        %s563 = scalar_lea.vmem %s3, %s562
      $region48: #{fwd.2} parent=43 // pred_fallthru
        _
      // Predicated region
      $region49: #{fwd.2} parent=43 // pred_check
        %p564 = pneg %p120
      $region50: #{fwd.2} parent=43 // pred_check_branch
        %566 = sbr.rel (%p564) target = $region52
      $region51: #{fwd.2} parent=43 // pred_region
        %p567 = scmp.lt.s32.totalorder %s24, 1
        %s568 = scalar_select %p567, %s24, 1
        %s569 = smul.addr %s568, 2
        %s570 = scalar_lea.vmem %s4, %s569
      $region52: #{fwd.2} parent=43 // pred_fallthru
        _
      // Predicated region
      $region53: #{fwd.2} parent=43 // pred_check
        %p571 = pneg %p146
      $region54: #{fwd.2} parent=43 // pred_check_branch
        %573 = sbr.rel (%p571) target = $region56
      $region55: #{fwd.2} parent=43 // pred_region
        %p574 = scmp.lt.s32.totalorder %s24, 1
        %s575 = scalar_select %p574, %s24, 1
        %s576 = smul.addr %s575, 2
        %s577 = scalar_lea.vmem %s5, %s576
      $region56: #{fwd.2} parent=43 // pred_fallthru
        _
    $region44: #{fwd.2} parent=5 // pred_fallthru
      _
  $region6: #{fwd.2} parent=0 // loop_footer
    %s22 = sadd.s32 1, %s18
  $region7: #{fwd.2} parent=0 // loop_footer_branch
    %17 = sbr.rel target = $region3
  $region8: #{fwd.2} parent=0 // loop_exit
    _

// kernel: fwd.3
$region0: #{fwd.3}
  #allocation0 [shape = 'u32[]', space=smem, size = 0x4, offset = 0x4, fixed_abs, tag = 'smem constant byte address 0x4 - core index']
  #allocation1 [shape = 'u32[144,128]{1,0:T(1,128)}', space=vmem, size = 0x12000, scoped, tag = 'internal scratch']
  #allocation2 [shape = 's32[1]{0}', space=sflag, size = 0x4, scoped, tag = 'scoped memory for fwd.3']
  #allocation3 [shape = 'u8[512]{0}', space=smem, size = 0x200, scoped, tag = 'prefetched SMEM operand 0']
  %s0 = inlined_call_operand.vmem [shape: s32[2], index: 0, kind: input, shape index: {}]
  %s1 = inlined_call_operand.vmem [shape: f32[2,2,256], index: 1, kind: input, shape index: {}]
  %s2 = inlined_call_operand.vmem [shape: bf16[2,2,8,256], index: 2, kind: input, shape index: {}]
  %s3 = inlined_call_operand.vmem [shape: f32[2,8,256], index: 3, kind: output, shape index: {}]
  %s4 = sld [smem:[#allocation0]]
  $region41: #{fwd.3} parent=0
    _
  %s6 = ssub.s32 1, %s4
  %s7 = scalar_select 0, %s6, %s4
  %s8 = sshll.u32 %s0, 4
  %s9 = int_to_ptr.vmem [resolvable:$true] %s8
  %11 = dma.vmem_to_smem %s9, 16, [#allocation3], [#allocation2]
  %12 = dma.done [#allocation2], 16
  %13 = sfence
  loop: start=0, step=1, limit=4
  $region2: #{fwd.3} parent=0 // loop_pre_header
    _
  $region3: #{fwd.3} parent=0 // loop_header
    %s15 = sphi 0, %s19
    %p16 = scmp.ge.s32.totalorder %s15, 4
    %s22 = sphi 0, %s34
    %s23 = sphi 0, %s30
    %s24 = sphi 0, %s22
    %s25 = sphi 0, %s23
    %s26 = sphi 0, %s24
    %s27 = sphi 0, %s25
    %s39 = sphi 0, %s41
    %s42 = sphi 0, %s39
    %s43 = sphi 0, %s42
    %s59 = sphi 0, %s43
    %s67 = sphi 0, %s69
    %s70 = sphi 0, %s67
    %s71 = sphi 0, %s70
    %s87 = sphi 0, %s71
    %s95 = sphi 0, %s97
    %s98 = sphi 0, %s95
    %s99 = sphi 0, %s98
    %s115 = sphi 0, %s99
  $region4: #{fwd.3} parent=0 // loop_header_branch
    %18 = sbr.rel (%p16) target = $region8
  $region5: #{fwd.3} parent=0 // loop_body
    %s20 = ssub.s32 %s15, 1
    %s21 = ssub.s32 %s15, 2
    %s28 = sadd.s32 1, %s23
    %p29 = scmp.ge.s32.totalorder %s28, 1
    %s30 = scalar_select %p29, 0, %s28
    %s31 = sadd.s32 1, %s22
    %s32 = scalar_select %p29, %s31, %s22
    %p33 = scmp.ge.s32.totalorder %s32, 2
    %s34 = scalar_select %p33, 0, %s32
    %s35 = ssub.s32 %s22, %s34
    %s36 = ssub.s32 %s23, %s30
    %s37 = sor.u32 %s35, %s36
    %p38 = scmp.eq.s32.totalorder %s37, 0
    %s40 = sadd.s32 %s39, 1
    %s41 = scalar_select %p38, %s39, %s40
    %p44 = pneg %p38
    %p45 = scmp.eq.s32.totalorder %s15, 1
    %p46 = por %p44, %p45
    %p47 = scmp.ne.s32.totalorder %s39, %s42
    %p48 = scmp.eq.s32.totalorder %s15, 0
    %p49 = por %p47, %p48
    %p50 = scmp.ne.s32.totalorder %s39, %s42
    %p51 = scmp.eq.s32.totalorder %s20, 1
    %p52 = por %p50, %p51
    %p53 = scmp.ne.s32.totalorder %s42, %s43
    %p54 = scmp.eq.s32.totalorder %s20, 0
    %p55 = por %p53, %p54
    %p56 = scmp.ne.s32.totalorder %s42, %s43
    %p57 = scmp.eq.s32.totalorder %s21, 1
    %p58 = por %p56, %p57
    %p60 = scmp.ne.s32.totalorder %s43, %s59
    %p61 = scmp.eq.s32.totalorder %s21, 0
    %p62 = por %p60, %p61
    %s63 = ssub.s32 %s22, %s34
    %s64 = ssub.s32 %s23, %s30
    %s65 = sor.u32 %s63, %s64
    %p66 = scmp.eq.s32.totalorder %s65, 0
    %s68 = sadd.s32 %s67, 1
    %s69 = scalar_select %p66, %s67, %s68
    %p72 = pneg %p66
    %p73 = scmp.eq.s32.totalorder %s15, 1
    %p74 = por %p72, %p73
    %p75 = scmp.ne.s32.totalorder %s67, %s70
    %p76 = scmp.eq.s32.totalorder %s15, 0
    %p77 = por %p75, %p76
    %p78 = scmp.ne.s32.totalorder %s67, %s70
    %p79 = scmp.eq.s32.totalorder %s20, 1
    %p80 = por %p78, %p79
    %p81 = scmp.ne.s32.totalorder %s70, %s71
    %p82 = scmp.eq.s32.totalorder %s20, 0
    %p83 = por %p81, %p82
    %p84 = scmp.ne.s32.totalorder %s70, %s71
    %p85 = scmp.eq.s32.totalorder %s21, 1
    %p86 = por %p84, %p85
    %p88 = scmp.ne.s32.totalorder %s71, %s87
    %p89 = scmp.eq.s32.totalorder %s21, 0
    %p90 = por %p88, %p89
    %s91 = ssub.s32 %s22, %s34
    %s92 = ssub.s32 %s23, %s30
    %s93 = sor.u32 %s91, %s92
    %p94 = scmp.eq.s32.totalorder %s93, 0
    %s96 = sadd.s32 %s95, 1
    %s97 = scalar_select %p94, %s95, %s96
    %p100 = pneg %p94
    %p101 = scmp.eq.s32.totalorder %s15, 1
    %p102 = por %p100, %p101
    %p103 = scmp.ne.s32.totalorder %s95, %s98
    %p104 = scmp.eq.s32.totalorder %s15, 0
    %p105 = por %p103, %p104
    %p106 = scmp.ne.s32.totalorder %s95, %s98
    %p107 = scmp.eq.s32.totalorder %s20, 1
    %p108 = por %p106, %p107
    %p109 = scmp.ne.s32.totalorder %s98, %s99
    %p110 = scmp.eq.s32.totalorder %s20, 0
    %p111 = por %p109, %p110
    %p112 = scmp.ne.s32.totalorder %s98, %s99
    %p113 = scmp.eq.s32.totalorder %s21, 1
    %p114 = por %p112, %p113
    %p116 = scmp.ne.s32.totalorder %s99, %s115
    %p117 = scmp.eq.s32.totalorder %s21, 0
    %p118 = por %p116, %p117
    %p119 = scmp.le.s32.totalorder 1, %s15
    %p120 = scmp.lt.s32.totalorder %s15, 3
    %p121 = pnand %p119, %p120
    %p122 = pneg %p121
    // Predicated region
    $region9: #{fwd.3} parent=5 // pred_check
      _
    $region10: #{fwd.3} parent=5 // pred_check_branch
      %124 = sbr.rel (%p121) target = $region12
    $region11: #{fwd.3} parent=5 // pred_region
      %s125 = ssub.s32 %s15, 1
    $region12: #{fwd.3} parent=5 // pred_fallthru
      _
    %p126 = scmp.lt.s32.totalorder %s15, 2
    // Predicated region
    $region13: #{fwd.3} parent=5 // pred_check
      %p127 = pneg %p126
    $region14: #{fwd.3} parent=5 // pred_check_branch
      %129 = sbr.rel (%p127) target = $region16
    $region15: #{fwd.3} parent=5 // pred_region
      // Predicated region
      $region17: #{fwd.3} parent=15 // pred_check
        %p130 = pneg %p49
      $region18: #{fwd.3} parent=15 // pred_check_branch
        %132 = sbr.rel (%p130) target = $region20
      $region19: #{fwd.3} parent=15 // pred_region
        %s133 = smul.u32 2, %s23
        %p134 = scmp.lt.s32.totalorder %s22, 1
        %s135 = scalar_select %p134, %s22, 1
        %p136 = scmp.lt.s32.totalorder %s133, 1
        %s137 = scalar_select %p136, %s133, 1
        %s138 = smul.addr %s135, 2
        %s139 = sadd.s32 %s137, %s138
        %s140 = smul.addr %s139, 2
        %s141 = scalar_lea.vmem %s1, %s140
        %s142 = smul.u32 2, %s23
      $region20: #{fwd.3} parent=15 // pred_fallthru
        _
      // Predicated region
      $region21: #{fwd.3} parent=15 // pred_check
        %p143 = pneg %p77
      $region22: #{fwd.3} parent=15 // pred_check_branch
        %145 = sbr.rel (%p143) target = $region24
      $region23: #{fwd.3} parent=15 // pred_region
        %s146 = smul.u32 2, %s23
        %p147 = scmp.lt.s32.totalorder %s22, 1
        %s148 = scalar_select %p147, %s22, 1
        %p149 = scmp.lt.s32.totalorder %s146, 1
        %s150 = scalar_select %p149, %s146, 1
        %s151 = smul.addr %s148, 4
        %s152 = sadd.s32 %s150, %s151
        %s153 = smul.addr %s152, 4
        %s154 = scalar_lea.vmem %s2, %s153
        %s155 = smul.u32 2, %s23
      $region24: #{fwd.3} parent=15 // pred_fallthru
        _
    $region16: #{fwd.3} parent=5 // pred_fallthru
      _
    %p156 = scmp.le.s32.totalorder 1, %s15
    %p157 = scmp.lt.s32.totalorder %s15, 3
    %p158 = pnand %p156, %p157
    %p159 = pneg %p158
    // Predicated region
    $region25: #{fwd.3} parent=5 // pred_check
      _
    $region26: #{fwd.3} parent=5 // pred_check_branch
      %161 = sbr.rel (%p158) target = $region28
    $region27: #{fwd.3} parent=5 // pred_region
      %s162 = ssub.s32 %s15, 1
      %s163 = smul.u32 2, %s25
      %p164 = scmp.lt.s32.totalorder %s24, 1
      %s165 = scalar_select %p164, %s24, 1
      %p166 = scmp.lt.s32.totalorder %s163, 1
      %s167 = scalar_select %p166, %s163, 1
      %s168 = smul.addr %s165, 2
      %s169 = sadd.s32 %s167, %s168
      %s170 = smul.addr %s169, 2
      %s171 = scalar_lea.vmem %s1, %s170
      %p172 = pneg %p55
      %p173 = pneg %p52
      %s174 = smul.u32 2, %s25
      %p175 = scmp.lt.s32.totalorder %s24, 1
      %s176 = scalar_select %p175, %s24, 1
      %p177 = scmp.lt.s32.totalorder %s174, 1
      %s178 = scalar_select %p177, %s174, 1
      %s179 = smul.addr %s176, 4
      %s180 = sadd.s32 %s178, %s179
      %s181 = smul.addr %s180, 4
      %s182 = scalar_lea.vmem %s2, %s181
      %p183 = pneg %p83
      %p184 = pneg %p80
      %p185 = pneg %p111
      %p186 = pneg %p108
      %s187 = smul.u32 2, %s25
      %p188 = scmp.lt.s32.totalorder %s24, 1
      %s189 = scalar_select %p188, %s24, 1
      %p190 = scmp.lt.s32.totalorder %s187, 1
      %s191 = scalar_select %p190, %s187, 1
      %s192 = smul.addr %s189, 2
      %s193 = sadd.s32 %s191, %s192
      %s194 = smul.addr %s193, 8
      %s195 = scalar_lea.vmem %s3, %s194
      %s196 = smul.u32 2, %s25
      %p197 = scmp.lt.s32.totalorder %s24, 1
      %s198 = scalar_select %p197, %s24, 1
      %p199 = scmp.lt.s32.totalorder %s196, 1
      %s200 = scalar_select %p199, %s196, 1
      %s201 = smul.addr %s198, 2
      %s202 = sadd.s32 %s200, %s201
      %s203 = smul.addr %s202, 2
      %s204 = scalar_lea.vmem %s1, %s203
      %s205 = smul.u32 2, %s25
      %s206 = smul.u32 2, %s25
      %p207 = scmp.lt.s32.totalorder %s24, 1
      %s208 = scalar_select %p207, %s24, 1
      %p209 = scmp.lt.s32.totalorder %s206, 1
      %s210 = scalar_select %p209, %s206, 1
      %s211 = smul.addr %s208, 4
      %s212 = sadd.s32 %s210, %s211
      %s213 = smul.addr %s212, 4
      %s214 = scalar_lea.vmem %s2, %s213
      %s215 = smul.u32 2, %s25
      %s216 = smul.u32 2, %s25
      %p217 = scmp.lt.s32.totalorder %s24, 1
      %s218 = scalar_select %p217, %s24, 1
      %p219 = scmp.lt.s32.totalorder %s216, 1
      %s220 = scalar_select %p219, %s216, 1
      %s221 = smul.addr %s218, 2
      %s222 = sadd.s32 %s220, %s221
      %s223 = smul.addr %s222, 8
      %s224 = scalar_lea.vmem %s3, %s223
      %s225 = smul.u32 2, %s25
      %s226 = sld [smem:[#allocation3 + %s24]]
      %v227 = vld [vmem:[%s204] sm:$0xf]
      %v228 = vld [vmem:[%s214] sm:$0xff]
      %v229 = vunpack.c.l.bf16 %v228
      %v230 = vunpack.c.h.bf16 %v228
      %v231 = vmul.f32 %v229, %v229
      %v232 = vmul.f32 %v230, %v230
      %v233 = vrot.slane %v231, 4
      %v234 = vadd.f32 %v231, %v233
      %v235 = vrot.slane %v234, 2
      %v236 = vadd.f32 %v234, %v235
      %v237 = vrot.slane %v236, 1
      %v238 = vadd.f32 %v236, %v237
      %v239 = vrot.slane %v232, 4
      %v240 = vadd.f32 %v232, %v239
      %v241 = vrot.slane %v240, 2
      %v242 = vadd.f32 %v240, %v241
      %v243 = vrot.slane %v242, 1
      %v244 = vadd.f32 %v242, %v243
      %s245 = scalar_lea.vmem %s214, 8
      %v246 = vld [vmem:[%s245] sm:$0xff]
      %v247 = vunpack.c.l.bf16 %v246
      %v248 = vunpack.c.h.bf16 %v246
      %v249 = vmul.f32 %v229, %v247
      %v250 = vmul.f32 %v230, %v248
      %v251 = vrot.slane %v249, 4
      %v252 = vadd.f32 %v249, %v251
      %v253 = vrot.slane %v252, 2
      %v254 = vadd.f32 %v252, %v253
      %v255 = vrot.slane %v254, 1
      %v256 = vadd.f32 %v254, %v255
      %v257 = vrot.slane %v250, 4
      %v258 = vadd.f32 %v250, %v257
      %v259 = vrot.slane %v258, 2
      %v260 = vadd.f32 %v258, %v259
      %v261 = vrot.slane %v260, 1
      %v262 = vadd.f32 %v260, %v261
      %vm263 = vcmask 1040384
      %v264 = vsel %vm263, %v238, %v256
      %v265 = vsel %vm263, %v244, %v262
      %v266 = vlaneseq
      %v267 = vshrl.u32 %v266, 7
      %v268 = vstv %s226
      %vm269 = vcmp.lt.s32.totalorder %v267, %v268
      %v270 = vsel %vm269, 0.0, -1e+30
      %v273 = vcombine.low %v264, %v265
      %v275 = vunpack.c.l.s4 1983009808
      %v276 = vunpack.c.0.s8 %v275
      %v277 = vlaneseq
      %v278 = vshrl.u32 %v277, 7
      %v279 = vsub.s32 %v276, %v278
      %v280 = vrot.slane %v273, %v279
      %v282 = vmul.f32 %v227, %v280
      %v283 = vmul.f32 %v282, 0.35355338
      %v286 = vunpack.c.l.s4 269488144
      %v287 = vunpack.c.0.s8 %v286
      %v288 = vlaneseq
      %v289 = vshrl.u32 %v288, 7
      %v290 = vsub.s32 %v287, %v289
      %v291 = vrot.slane %v270, %v290
      %v293 = vadd.f32 %v283, %v291
      %v296 = vunpack.c.l.s4 1983009808
      %v297 = vunpack.c.0.s8 %v296
      %v298 = vlaneseq
      %v299 = vshrl.u32 %v298, 7
      %v300 = vsub.s32 %v297, %v299
      %v301 = vrot.slane %v293, %v300
      %v302 = vcombine.high %v301, %v301
      %vm305 = vcmask 1041408
      %v306 = vsel %vm305, %v301, -inf
      %v307 = vrot.slane %v306, 4
      %v308 = vmax.f32 %v306, %v307
      %v309 = vrot.slane %v308, 2
      %v310 = vmax.f32 %v308, %v309
      %v311 = vrot.slane %v310, 1
      %v312 = vmax.f32 %v310, %v311
      %v313 = vsel %vm305, %v302, -inf
      %v314 = vrot.slane %v313, 4
      %v315 = vmax.f32 %v313, %v314
      %v316 = vrot.slane %v315, 2
      %v317 = vmax.f32 %v315, %v316
      %v318 = vrot.slane %v317, 1
      %v319 = vmax.f32 %v317, %v318
      %v322 = vcombine.low %v312, %v319
      %v324 = vunpack.c.l.s4 1983009808
      %v325 = vunpack.c.0.s8 %v324
      %v326 = vlaneseq
      %v327 = vshrl.u32 %v326, 7
      %v328 = vsub.s32 %v325, %v327
      %v329 = vrot.slane %v322, %v328
      %v331 = vsub.f32 %v293, %v329
      %v332 = vmul.f32 %v331, 1.442695
      %v333 = vpow.pop %v332
      %v336 = vunpack.c.l.s4 1983009808
      %v337 = vunpack.c.0.s8 %v336
      %v338 = vlaneseq
      %v339 = vshrl.u32 %v338, 7
      %v340 = vsub.s32 %v337, %v339
      %v341 = vrot.slane %v333, %v340
      %v342 = vcombine.high %v341, %v341
      %v345 = vsel %vm305, %v341, 0.0
      %v346 = vrot.slane %v345, 4
      %v347 = vadd.f32 %v345, %v346
      %v348 = vrot.slane %v347, 2
      %v349 = vadd.f32 %v347, %v348
      %v350 = vrot.slane %v349, 1
      %v351 = vadd.f32 %v349, %v350
      %v352 = vsel %vm305, %v342, 0.0
      %v353 = vrot.slane %v352, 4
      %v354 = vadd.f32 %v352, %v353
      %v355 = vrot.slane %v354, 2
      %v356 = vadd.f32 %v354, %v355
      %v357 = vrot.slane %v356, 1
      %v358 = vadd.f32 %v356, %v357
      %v359 = vrcp.pop %v351
      %v360 = vrcp.pop %v358
      %v363 = vcombine.low %v359, %v360
      %v365 = vunpack.c.l.s4 1983009808
      %v366 = vunpack.c.0.s8 %v365
      %v367 = vlaneseq
      %v368 = vshrl.u32 %v367, 7
      %v369 = vsub.s32 %v366, %v368
      %v370 = vrot.slane %v363, %v369
      %v372 = vmul.f32 %v333, %v370
      %v373 = vmul.f32 %v372, %v227
      %v375 = vlaneseq
      %v376 = vshrl.u32 %v375, 7
      %v377 = vsub.s32 0, %v376
      %v378 = vrot.slane %v373, %v377
      %v379 = vlaneseq
      %v380 = vshrl.u32 %v379, 7
      %v381 = vsub.s32 2, %v380
      %v382 = vrot.slane %v373, %v381
      %v385 = vlaneseq
      %v386 = vshrl.u32 %v385, 7
      %v387 = vsub.s32 0, %v386
      %v388 = vrot.slane %v378, %v387
      %v389 = vlaneseq
      %v390 = vshrl.u32 %v389, 7
      %v391 = vsub.s32 0, %v390
      %v392 = vrot.slane %v382, %v391
      %v393 = vmul.f32 %v388, %v229
      %v394 = vmul.f32 %v392, %v230
      %v395 = vlaneseq
      %v396 = vshrl.u32 %v395, 7
      %v397 = vsub.s32 1, %v396
      %v398 = vrot.slane %v373, %v397
      %v399 = vlaneseq
      %v400 = vshrl.u32 %v399, 7
      %v401 = vsub.s32 3, %v400
      %v402 = vrot.slane %v373, %v401
      %v405 = vlaneseq
      %v406 = vshrl.u32 %v405, 7
      %v407 = vsub.s32 1, %v406
      %v408 = vrot.slane %v398, %v407
      %v409 = vlaneseq
      %v410 = vshrl.u32 %v409, 7
      %v411 = vsub.s32 1, %v410
      %v412 = vrot.slane %v402, %v411
      %v413 = vmul.f32 %v408, %v247
      %v414 = vmul.f32 %v412, %v248
      %v415 = vadd.f32 %v393, %v413
      %v416 = vadd.f32 %v394, %v414
      %417 = vst [vmem:[%s224] sm:$0xff] %v415
      %418 = vst [vmem:[%s224 + $0x8] sm:$0xff] %v416
      %s419 = smul.u32 2, %s25
      %p420 = scmp.lt.s32.totalorder %s24, 1
      %s421 = scalar_select %p420, %s24, 1
      %p422 = scmp.lt.s32.totalorder %s419, 1
      %s423 = scalar_select %p422, %s419, 1
      %s424 = smul.addr %s421, 2
      %s425 = sadd.s32 %s423, %s424
      %s426 = smul.addr %s425, 8
      %s427 = scalar_lea.vmem %s3, %s426
      // Predicated region
      $region29: #{fwd.3} parent=27 // pred_check
        %p428 = pneg %p108
      $region30: #{fwd.3} parent=27 // pred_check_branch
        %430 = sbr.rel (%p428) target = $region32
      $region31: #{fwd.3} parent=27 // pred_region
        %s431 = smul.u32 2, %s25
      $region32: #{fwd.3} parent=27 // pred_fallthru
        _
    $region28: #{fwd.3} parent=5 // pred_fallthru
      _
    %p432 = scmp.le.s32.totalorder 2, %s15
    // Predicated region
    $region33: #{fwd.3} parent=5 // pred_check
      %p433 = pneg %p432
    $region34: #{fwd.3} parent=5 // pred_check_branch
      %435 = sbr.rel (%p433) target = $region36
    $region35: #{fwd.3} parent=5 // pred_region
      %s436 = ssub.s32 %s15, 2
      // Predicated region
      $region37: #{fwd.3} parent=35 // pred_check
        %p437 = pneg %p114
      $region38: #{fwd.3} parent=35 // pred_check_branch
        %439 = sbr.rel (%p437) target = $region40
      $region39: #{fwd.3} parent=35 // pred_region
        %s440 = smul.u32 2, %s27
        %p441 = scmp.lt.s32.totalorder %s26, 1
        %s442 = scalar_select %p441, %s26, 1
        %p443 = scmp.lt.s32.totalorder %s440, 1
        %s444 = scalar_select %p443, %s440, 1
        %s445 = smul.addr %s442, 2
        %s446 = sadd.s32 %s444, %s445
        %s447 = smul.addr %s446, 8
        %s448 = scalar_lea.vmem %s3, %s447
      $region40: #{fwd.3} parent=35 // pred_fallthru
        _
    $region36: #{fwd.3} parent=5 // pred_fallthru
      _
  $region6: #{fwd.3} parent=0 // loop_footer
    %s19 = sadd.s32 1, %s15
  $region7: #{fwd.3} parent=0 // loop_footer_branch
    %14 = sbr.rel target = $region3
  $region8: #{fwd.3} parent=0 // loop_exit
    _

</llo_original>
